<compile_context>
chip_gen: v7x
topology: tpu7x:2x2x1
jax: 0.10.0
libtpu: 0.0.40
codegen_flags: <defaults>
</compile_context>

<pallas_src>
import functools

import jax
import jax.numpy as jnp
from jax.experimental import pallas as pl
from jax.experimental.pallas import tpu as pltpu

# ----------------------------------------------------------------------------
# Configuration (AtomEncoder(emb_dim, feature_dims, sigma_embed_dim))
# ----------------------------------------------------------------------------
EMB_DIM = 32
CAT_DIMS = (5, 7, 3)          # feature_dims[0]: cardinalities of categorical feats
NUM_SCALAR_RAW = 2            # feature_dims[1]
SIGMA_EMBED_DIM = 6
NUM_CAT = len(CAT_DIMS)
NUM_SCALAR = NUM_SCALAR_RAW + SIGMA_EMBED_DIM
NUM_FEATURES = NUM_CAT + NUM_SCALAR
MAX_CARD = max(CAT_DIMS)

E_PAD = 128                   # lane-dense output / weight width (>= EMB_DIM)
TILE_N = 128                  # atoms per grid step (use 1024-8192 for large N)
N_ATOMS = 256                 # demo batch: 2 grid steps, exercises tiling


# ----------------------------------------------------------------------------
# Pallas kernel
# ----------------------------------------------------------------------------
def atom_encoder_kernel(x_ref, wtab_ref, wlin_ref, o_ref, *, num_cat, max_card):
    """One (TILE_N,) tile of the fused AtomEncoder forward.

    x_ref    : (TN, F+1) f32   -- [cat indices (float) | scalar feats | 1.0]
    wtab_ref : (num_cat*max_card, E_PAD) f32 -- stacked zero-padded embedding tables
    wlin_ref : (F+1, E_PAD) f32 -- rows [0,num_cat) zero, then Linear W^T, last row = bias
    o_ref    : (TN, E_PAD) f32 -- columns [EMB_DIM, E_PAD) are zero padding
    """
    x = x_ref[...]                                        # (TN, F+1)
    tn = x.shape[0]

    # Multi-hot block for all categorical features: one iota, one cast.
    cat_idx = x[:, :num_cat].astype(jnp.int32)            # (TN, num_cat)
    lane_iota = jax.lax.broadcasted_iota(
        jnp.int32, (tn, num_cat * max_card), 1)           # (TN, NC*MC)
    multihot = jnp.zeros((tn, num_cat * max_card), jnp.float32)
    for i in range(num_cat):                              # num_cat is tiny; unrolled
        multihot = multihot + (
            lane_iota == (cat_idx[:, i:i + 1] + i * max_card)
        ).astype(jnp.float32)

    # Embedding lookups for all categorical features: single MXU pass.
    acc = jnp.dot(multihot, wtab_ref[...], preferred_element_type=jnp.float32)

    # Linear(scalars) + bias, fused: x (with ones column) @ [0; W^T; b].
    acc = acc + jnp.dot(x, wlin_ref[...], preferred_element_type=jnp.float32)

    o_ref[...] = acc


# ----------------------------------------------------------------------------
# Wrapper
# ----------------------------------------------------------------------------
def atom_encoder(x, w_tab, w_lin, *, tile_n=TILE_N):
    """x: (N, NUM_FEATURES) float32 -> (N, EMB_DIM) float32."""
    n = x.shape[0]

    # Append the all-ones column that turns the bias into a matmul row.
    x_aug = jnp.concatenate([x, jnp.ones((n, 1), x.dtype)], axis=1)   # (N, F+1)
    f_aug = x_aug.shape[1]

    # Pad the atom axis to a multiple of the tile; padded rows are sliced off.
    tile_n = min(tile_n, max(8, n))
    n_pad = pl.cdiv(n, tile_n) * tile_n
    if n_pad != n:
        x_aug = jnp.pad(x_aug, ((0, n_pad - n), (0, 0)))

    kernel = functools.partial(
        atom_encoder_kernel, num_cat=NUM_CAT, max_card=MAX_CARD)

    out = pl.pallas_call(
        kernel,
        out_shape=jax.ShapeDtypeStruct((n_pad, E_PAD), jnp.float32),
        grid_spec=pltpu.PrefetchScalarGridSpec(
            num_scalar_prefetch=0,
            grid=(n_pad // tile_n,),
            in_specs=[
                pl.BlockSpec((tile_n, f_aug), lambda i: (i, 0)),
                # Weights: same block every step -> stay VMEM-resident (no re-DMA).
                pl.BlockSpec((NUM_CAT * MAX_CARD, E_PAD), lambda i: (0, 0)),
                pl.BlockSpec((f_aug, E_PAD), lambda i: (0, 0)),
            ],
            out_specs=pl.BlockSpec((tile_n, E_PAD), lambda i: (i, 0)),
        ),
        compiler_params=pltpu.CompilerParams(
            # Atom tiles are independent -> megacore-shardable on v7x.
            dimension_semantics=("parallel",)),
    )(x_aug, w_tab, w_lin)

    return out[:n, :EMB_DIM]


# ----------------------------------------------------------------------------
# Parameter packing + pure-JAX reference
# ----------------------------------------------------------------------------
def pack_params(tables, w, b):
    """tables: list of (dim_i, EMB_DIM); w: (NUM_SCALAR, EMB_DIM) = W^T; b: (EMB_DIM,)."""
    padded = [jnp.pad(t, ((0, MAX_CARD - t.shape[0]), (0, 0))) for t in tables]
    w_tab = jnp.concatenate(padded, axis=0)                      # (NC*MC, EMB_DIM)
    w_lin = jnp.concatenate(
        [jnp.zeros((NUM_CAT, EMB_DIM), jnp.float32),             # categorical cols: no-op
         w,                                                      # Linear weight (W^T)
         b[None, :]], axis=0)                                    # bias row (ones column)
    # Lane-dense output: pad the output dimension of both weights to 128 lanes.
    w_tab = jnp.pad(w_tab, ((0, 0), (0, E_PAD - EMB_DIM)))
    w_lin = jnp.pad(w_lin, ((0, 0), (0, E_PAD - EMB_DIM)))
    return w_tab, w_lin


def atom_encoder_ref(x, tables, w, b):
    acc = jnp.zeros((x.shape[0], EMB_DIM), jnp.float32)
    for i in range(NUM_CAT):
        acc = acc + tables[i][x[:, i].astype(jnp.int32)]
    acc = acc + x[:, NUM_CAT:NUM_CAT + NUM_SCALAR] @ w + b
    return acc


# ----------------------------------------------------------------------------
# Deterministic parameter / input construction
# ----------------------------------------------------------------------------
def make_params(key):
    keys = jax.random.split(key, NUM_CAT + 2)
    tables = []
    for i, dim in enumerate(CAT_DIMS):                           # xavier-uniform
        bound = (6.0 / (dim + EMB_DIM)) ** 0.5
        tables.append(jax.random.uniform(keys[i], (dim, EMB_DIM), jnp.float32,
                                         minval=-bound, maxval=bound))
    wb = (1.0 / NUM_SCALAR) ** 0.5
    w = jax.random.uniform(keys[-2], (NUM_SCALAR, EMB_DIM), jnp.float32,
                           minval=-wb, maxval=wb)                # stored as W^T
    b = jax.random.uniform(keys[-1], (EMB_DIM,), jnp.float32,
                           minval=-wb, maxval=wb)
    return tables, w, b


def make_input(key, n_atoms):
    k_idx, k_sc = jax.random.split(key)
    idx_keys = jax.random.split(k_idx, NUM_CAT)
    cat_cols = [jax.random.randint(idx_keys[i], (n_atoms, 1), 0, CAT_DIMS[i])
                .astype(jnp.float32) for i in range(NUM_CAT)]
    scalars = jax.random.normal(k_sc, (n_atoms, NUM_SCALAR), jnp.float32)
    return jnp.concatenate(cat_cols + [scalars], axis=1)         # (N, NUM_FEATURES)


if __name__ == "__main__":
    key = jax.random.PRNGKey(0)
    k_param, k_in = jax.random.split(key)
    tables, w, b = make_params(k_param)
    x = make_input(k_in, N_ATOMS)

    w_tab, w_lin = pack_params(tables, w, b)

    out = atom_encoder(x, w_tab, w_lin)
    out = jax.block_until_ready(out)

    ref = atom_encoder_ref(x, tables, w, b)
    assert out.shape == (N_ATOMS, EMB_DIM)
    assert jnp.allclose(out, ref, atol=1e-4, rtol=1e-4)

    # TODO(synk): lm_embedding_type='esm' branch (extra Linear on a 1280-dim LM embedding)
    # is not exercised here since the configured lm_embedding_type is None.

    print("KERNEL_OK")
</pallas_src>

<mosaic_0001>
module attributes {stable_mosaic.version = 11 : i64} {
  func.func @atom_encoder_kernel(%arg0: i32, %arg1: memref<128x12xf32, #tpu.memory_space<vmem>>, %arg2: memref<21x128xf32, #tpu.memory_space<vmem>>, %arg3: memref<12x128xf32, #tpu.memory_space<vmem>>, %arg4: memref<128x128xf32, #tpu.memory_space<vmem>>) attributes {dimension_semantics = [#tpu.dimension_semantics<parallel>], iteration_bounds = array<i64: 2>, scalar_prefetch = 0 : i64, scratch_operands = 0 : i64, tpu.core_type = #tpu.core_type<tc>, window_params = [{transform_indices = @transform_0, window_bounds = array<i64: 128, 12>}, {pipeline_mode = #tpu.pipeline_mode<synchronous>, transform_indices = @transform_1, window_bounds = array<i64: 21, 128>}, {pipeline_mode = #tpu.pipeline_mode<synchronous>, transform_indices = @transform_2, window_bounds = array<i64: 12, 128>}, {transform_indices = @transform_3, window_bounds = array<i64: 128, 128>}]} {
    %c0 = arith.constant 0 : index
    %c0_0 = arith.constant 0 : index
    %0 = vector.load %arg1[%c0, %c0_0] : memref<128x12xf32, #tpu.memory_space<vmem>>, vector<128x12xf32>
    %1 = vector.extract_strided_slice %0 {offsets = [0, 0], sizes = [128, 3], strides = [1, 1]} : vector<128x12xf32> to vector<128x3xf32>
    %2 = arith.fptosi %1 : vector<128x3xf32> to vector<128x3xi32>
    %3 = tpu.iota {dimensions = array<i32: 1>} : vector<128x21xi32>
    %cst = arith.constant 0.000000e+00 : f32
    %4 = vector.broadcast %cst : f32 to vector<128x21xf32>
    %5 = vector.extract_strided_slice %2 {offsets = [0, 0], sizes = [128, 1], strides = [1, 1]} : vector<128x3xi32> to vector<128x1xi32>
    %c0_i32 = arith.constant 0 : i32
    %6 = vector.broadcast %c0_i32 : i32 to vector<128x1xi32>
    %7 = arith.addi %5, %6 : vector<128x1xi32>
    %8 = vector.broadcast %7 : vector<128x1xi32> to vector<128x21xi32>
    %9 = arith.cmpi eq, %3, %8 : vector<128x21xi32>
    %10 = arith.extui %9 : vector<128x21xi1> to vector<128x21xi32>
    %11 = arith.sitofp %10 : vector<128x21xi32> to vector<128x21xf32>
    %12 = arith.addf %4, %11 : vector<128x21xf32>
    %13 = vector.extract_strided_slice %2 {offsets = [0, 1], sizes = [128, 1], strides = [1, 1]} : vector<128x3xi32> to vector<128x1xi32>
    %c7_i32 = arith.constant 7 : i32
    %14 = vector.broadcast %c7_i32 : i32 to vector<128x1xi32>
    %15 = arith.addi %13, %14 : vector<128x1xi32>
    %16 = vector.broadcast %15 : vector<128x1xi32> to vector<128x21xi32>
    %17 = arith.cmpi eq, %3, %16 : vector<128x21xi32>
    %18 = arith.extui %17 : vector<128x21xi1> to vector<128x21xi32>
    %19 = arith.sitofp %18 : vector<128x21xi32> to vector<128x21xf32>
    %20 = arith.addf %12, %19 : vector<128x21xf32>
    %21 = vector.extract_strided_slice %2 {offsets = [0, 2], sizes = [128, 1], strides = [1, 1]} : vector<128x3xi32> to vector<128x1xi32>
    %c14_i32 = arith.constant 14 : i32
    %22 = vector.broadcast %c14_i32 : i32 to vector<128x1xi32>
    %23 = arith.addi %21, %22 : vector<128x1xi32>
    %24 = vector.broadcast %23 : vector<128x1xi32> to vector<128x21xi32>
    %25 = arith.cmpi eq, %3, %24 : vector<128x21xi32>
    %26 = arith.extui %25 : vector<128x21xi1> to vector<128x21xi32>
    %27 = arith.sitofp %26 : vector<128x21xi32> to vector<128x21xf32>
    %28 = arith.addf %20, %27 : vector<128x21xf32>
    %c0_1 = arith.constant 0 : index
    %c0_2 = arith.constant 0 : index
    %29 = vector.load %arg2[%c0_1, %c0_2] : memref<21x128xf32, #tpu.memory_space<vmem>>, vector<21x128xf32>
    %cst_3 = arith.constant dense<0.000000e+00> : vector<128x128xf32>
    %30 = tpu.matmul %28, %29, %cst_3 {dimension_numbers = #tpu.dot_dimension_numbers<[1], [0], [0], [1], [0, 0, 1, 1], [], []>} : vector<128x21xf32>, vector<21x128xf32>, vector<128x128xf32> -> vector<128x128xf32>
    %c0_4 = arith.constant 0 : index
    %c0_5 = arith.constant 0 : index
    %31 = vector.load %arg3[%c0_4, %c0_5] : memref<12x128xf32, #tpu.memory_space<vmem>>, vector<12x128xf32>
    %cst_6 = arith.constant dense<0.000000e+00> : vector<128x128xf32>
    %32 = tpu.matmul %0, %31, %cst_6 {dimension_numbers = #tpu.dot_dimension_numbers<[1], [0], [0], [1], [0, 0, 1, 1], [], []>} : vector<128x12xf32>, vector<12x128xf32>, vector<128x128xf32> -> vector<128x128xf32>
    %33 = arith.addf %30, %32 : vector<128x128xf32>
    %c0_7 = arith.constant 0 : index
    %c0_8 = arith.constant 0 : index
    %34 = vector.load %arg4[%c0_7, %c0_8] : memref<128x128xf32, #tpu.memory_space<vmem>>, vector<128x128xf32>
    tpu.vector_store %arg4[%c0_7, %c0_8], %33 {strides = array<i32>} : memref<128x128xf32, #tpu.memory_space<vmem>>, vector<128x128xf32>,
    return
  }
  func.func @transform_0(%arg0: i32) -> (i32, i32) {
    %c0_i32 = arith.constant 0 : i32
    %c0_i32_0 = arith.constant 0 : i32
    return %arg0, %c0_i32 : i32, i32
  }
  func.func @transform_1(%arg0: i32) -> (i32, i32) {
    %c0_i32 = arith.constant 0 : i32
    %c0_i32_0 = arith.constant 0 : i32
    %c0_i32_1 = arith.constant 0 : i32
    return %c0_i32, %c0_i32_0 : i32, i32
  }
  func.func @transform_2(%arg0: i32) -> (i32, i32) {
    %c0_i32 = arith.constant 0 : i32
    %c0_i32_0 = arith.constant 0 : i32
    %c0_i32_1 = arith.constant 0 : i32
    return %c0_i32, %c0_i32_0 : i32, i32
  }
  func.func @transform_3(%arg0: i32) -> (i32, i32) {
    %c0_i32 = arith.constant 0 : i32
    %c0_i32_0 = arith.constant 0 : i32
    return %arg0, %c0_i32 : i32, i32
  }
}

</mosaic_0001>

<llo_original>
// kernel: tpu_custom_call.1
$region0: #{tpu_custom_call.1}
  #allocation0 [shape = 'u32[]', space=smem, size = 0x4, offset = 0x4, fixed_abs, tag = 'smem constant byte address 0x4 - core index']
  #allocation1 [shape = 'u32[144,128]{1,0:T(1,128)}', space=vmem, size = 0x12000, scoped, tag = 'internal scratch']
  %s0 = inlined_call_operand.vmem [shape: f32[256,12], index: 0, kind: input, shape index: {}]
  %s1 = inlined_call_operand.vmem [shape: f32[21,128], index: 1, kind: input, shape index: {}]
  %s2 = inlined_call_operand.vmem [shape: f32[12,128], index: 2, kind: input, shape index: {}]
  %s3 = inlined_call_operand.hbm [shape: f32[256,128], index: 3, kind: output, shape index: {}]
  %s4 = sld [smem:[#allocation0]]
  $region45: #{tpu_custom_call.1} parent=0
    _
  %s6 = ssub.s32 1, %s4
  %s7 = scalar_select 0, %s6, %s4
  $region1: #{tpu_custom_call.1} parent=0
    #allocation2 [shape = 'u8[131072]{0}', space=vmem, size = 0x20000, scoped, tag = 'output window, operand 0']
    #allocation3 [shape = 's32[2]{0}', space=sflag, size = 0x8, scoped, tag = 'scoped memory for tpu_custom_call.1']
    %8 = vsyncpa [#allocation3], 0
    %s9 = scalar_lea.sflag [#allocation3], 1
    %10 = vsyncpa %s9, 0
    loop: start=0, step=1, limit=4
    $region2: #{tpu_custom_call.1} parent=1 // loop_pre_header
      _
    $region3: #{tpu_custom_call.1} parent=1 // loop_header
      %s12 = sphi 0, %s16
      %p13 = scmp.ge.s32.totalorder %s12, 4
      %s22 = sphi 0, %s24
      %s25 = sphi 0, %s22
      %s26 = sphi 0, %s25
      %s42 = sphi 0, %s26
      %s46 = sphi 0, %s46
      %s48 = sphi 0, %s46
      %s49 = sphi 0, %s48
      %s63 = sphi 0, %s49
      %s67 = sphi 0, %s67
      %s69 = sphi 0, %s67
      %s70 = sphi 0, %s69
      %s84 = sphi 0, %s70
      %s90 = sphi 0, %s92
      %s93 = sphi 0, %s90
      %s94 = sphi 0, %s93
      %s110 = sphi 0, %s94
    $region4: #{tpu_custom_call.1} parent=1 // loop_header_branch
      %15 = sbr.rel (%p13) target = $region8
    $region5: #{tpu_custom_call.1} parent=1 // loop_body
      %s17 = ssub.s32 %s12, 1
      %s18 = ssub.s32 %s12, 2
      %s19 = sadd.s32 %s12, 1
      %s20 = ssub.s32 %s12, %s19
      %p21 = scmp.eq.s32.totalorder %s20, 0
      %s23 = sadd.s32 %s22, 1
      %s24 = scalar_select %p21, %s22, %s23
      %p27 = pneg %p21
      %p28 = scmp.eq.s32.totalorder %s12, 1
      %p29 = por %p27, %p28
      %p30 = scmp.ne.s32.totalorder %s22, %s25
      %p31 = scmp.eq.s32.totalorder %s12, 0
      %p32 = por %p30, %p31
      %p33 = scmp.ne.s32.totalorder %s22, %s25
      %p34 = scmp.eq.s32.totalorder %s17, 1
      %p35 = por %p33, %p34
      %p36 = scmp.ne.s32.totalorder %s25, %s26
      %p37 = scmp.eq.s32.totalorder %s17, 0
      %p38 = por %p36, %p37
      %p39 = scmp.ne.s32.totalorder %s25, %s26
      %p40 = scmp.eq.s32.totalorder %s18, 1
      %p41 = por %p39, %p40
      %p43 = scmp.ne.s32.totalorder %s26, %s42
      %p44 = scmp.eq.s32.totalorder %s18, 0
      %p45 = por %p43, %p44
      %s47 = sadd.s32 %s46, 1
      %p50 = scmp.eq.s32.totalorder %s12, 1
      %p51 = scmp.ne.s32.totalorder %s46, %s48
      %p52 = scmp.eq.s32.totalorder %s12, 0
      %p53 = por %p51, %p52
      %p54 = scmp.ne.s32.totalorder %s46, %s48
      %p55 = scmp.eq.s32.totalorder %s17, 1
      %p56 = por %p54, %p55
      %p57 = scmp.ne.s32.totalorder %s48, %s49
      %p58 = scmp.eq.s32.totalorder %s17, 0
      %p59 = por %p57, %p58
      %p60 = scmp.ne.s32.totalorder %s48, %s49
      %p61 = scmp.eq.s32.totalorder %s18, 1
      %p62 = por %p60, %p61
      %p64 = scmp.ne.s32.totalorder %s49, %s63
      %p65 = scmp.eq.s32.totalorder %s18, 0
      %p66 = por %p64, %p65
      %s68 = sadd.s32 %s67, 1
      %p71 = scmp.eq.s32.totalorder %s12, 1
      %p72 = scmp.ne.s32.totalorder %s67, %s69
      %p73 = scmp.eq.s32.totalorder %s12, 0
      %p74 = por %p72, %p73
      %p75 = scmp.ne.s32.totalorder %s67, %s69
      %p76 = scmp.eq.s32.totalorder %s17, 1
      %p77 = por %p75, %p76
      %p78 = scmp.ne.s32.totalorder %s69, %s70
      %p79 = scmp.eq.s32.totalorder %s17, 0
      %p80 = por %p78, %p79
      %p81 = scmp.ne.s32.totalorder %s69, %s70
      %p82 = scmp.eq.s32.totalorder %s18, 1
      %p83 = por %p81, %p82
      %p85 = scmp.ne.s32.totalorder %s70, %s84
      %p86 = scmp.eq.s32.totalorder %s18, 0
      %p87 = por %p85, %p86
      %s88 = ssub.s32 %s12, %s19
      %p89 = scmp.eq.s32.totalorder %s88, 0
      %s91 = sadd.s32 %s90, 1
      %s92 = scalar_select %p89, %s90, %s91
      %p95 = pneg %p89
      %p96 = scmp.eq.s32.totalorder %s12, 1
      %p97 = por %p95, %p96
      %p98 = scmp.ne.s32.totalorder %s90, %s93
      %p99 = scmp.eq.s32.totalorder %s12, 0
      %p100 = por %p98, %p99
      %p101 = scmp.ne.s32.totalorder %s90, %s93
      %p102 = scmp.eq.s32.totalorder %s17, 1
      %p103 = por %p101, %p102
      %p104 = scmp.ne.s32.totalorder %s93, %s94
      %p105 = scmp.eq.s32.totalorder %s17, 0
      %p106 = por %p104, %p105
      %p107 = scmp.ne.s32.totalorder %s93, %s94
      %p108 = scmp.eq.s32.totalorder %s18, 1
      %p109 = por %p107, %p108
      %p111 = scmp.ne.s32.totalorder %s94, %s110
      %p112 = scmp.eq.s32.totalorder %s18, 0
      %p113 = por %p111, %p112
      %p114 = scmp.le.s32.totalorder 1, %s12
      %p115 = scmp.lt.s32.totalorder %s12, 3
      %p116 = pnand %p114, %p115
      %p117 = pneg %p116
      // Predicated region
      $region9: #{tpu_custom_call.1} parent=5 // pred_check
        _
      $region10: #{tpu_custom_call.1} parent=5 // pred_check_branch
        %119 = sbr.rel (%p116) target = $region12
      $region11: #{tpu_custom_call.1} parent=5 // pred_region
        %s120 = ssub.s32 %s12, 1
        // Predicated region
        $region13: #{tpu_custom_call.1} parent=11 // pred_check
          %p121 = pneg %p59
        $region14: #{tpu_custom_call.1} parent=11 // pred_check_branch
          %123 = sbr.rel (%p121) target = $region16
        $region15: #{tpu_custom_call.1} parent=11 // pred_region
          _
        $region16: #{tpu_custom_call.1} parent=11 // pred_fallthru
          _
        // Predicated region
        $region17: #{tpu_custom_call.1} parent=11 // pred_check
          %p124 = pneg %p80
        $region18: #{tpu_custom_call.1} parent=11 // pred_check_branch
          %126 = sbr.rel (%p124) target = $region20
        $region19: #{tpu_custom_call.1} parent=11 // pred_region
          _
        $region20: #{tpu_custom_call.1} parent=11 // pred_fallthru
          _
      $region12: #{tpu_custom_call.1} parent=5 // pred_fallthru
        _
      %p127 = scmp.lt.s32.totalorder %s12, 2
      // Predicated region
      $region21: #{tpu_custom_call.1} parent=5 // pred_check
        %p128 = pneg %p127
      $region22: #{tpu_custom_call.1} parent=5 // pred_check_branch
        %130 = sbr.rel (%p128) target = $region24
      $region23: #{tpu_custom_call.1} parent=5 // pred_region
        // Predicated region
        $region25: #{tpu_custom_call.1} parent=23 // pred_check
          %p131 = pneg %p32
        $region26: #{tpu_custom_call.1} parent=23 // pred_check_branch
          %133 = sbr.rel (%p131) target = $region28
        $region27: #{tpu_custom_call.1} parent=23 // pred_region
          %s134 = smul.u32 16, %s12
          %p135 = scmp.lt.s32.totalorder %s134, 31
          %s136 = scalar_select %p135, %s134, 31
          %s137 = smul.addr %s136, 8
          %s138 = scalar_lea.vmem %s0, %s137
          %s139 = smul.u32 16, %s12
        $region28: #{tpu_custom_call.1} parent=23 // pred_fallthru
          _
      $region24: #{tpu_custom_call.1} parent=5 // pred_fallthru
        _
      %p140 = scmp.le.s32.totalorder 1, %s12
      %p141 = scmp.lt.s32.totalorder %s12, 3
      %p142 = pnand %p140, %p141
      %p143 = pneg %p142
      // Predicated region
      $region29: #{tpu_custom_call.1} parent=5 // pred_check
        _
      $region30: #{tpu_custom_call.1} parent=5 // pred_check_branch
        %145 = sbr.rel (%p142) target = $region32
      $region31: #{tpu_custom_call.1} parent=5 // pred_region
        %s146 = ssub.s32 %s12, 1
        %s147 = smul.u32 16, %s17
        %p148 = scmp.lt.s32.totalorder %s147, 31
        %s149 = scalar_select %p148, %s147, 31
        %s150 = smul.addr %s149, 8
        %s151 = scalar_lea.vmem %s0, %s150
        %p152 = pneg %p38
        %p153 = pneg %p35
        %p154 = pneg %p59
        %p155 = pneg %p56
        %p156 = pneg %p80
        %p157 = pneg %p77
        %p158 = pneg %p106
        %p159 = pneg %p103
        %s160 = sand.u32 %s93, 1
        %s161 = scalar_lea.sflag [#allocation3], %s160
        %s162 = sand.u32 %s93, 1
        %s163 = smul.addr %s162, 128
        %s164 = scalar_lea.vmem [#allocation2], %s163
        %s165 = smul.u32 16, %s17
        %p166 = scmp.lt.s32.totalorder %s165, 31
        %s167 = scalar_select %p166, %s165, 31
        %s168 = smul.addr %s167, 8
        %s169 = scalar_lea.vmem %s0, %s168
        %s170 = smul.u32 16, %s17
        %s171 = smul.u32 16, %s17
        %v172 = vld [vmem:[%s169] sm:$0xff]
        %v173 = vld [vmem:[%s169 + $0x8] sm:$0xff]
        %v174 = vld [vmem:[%s169 + $0x10] sm:$0xff]
        %v175 = vld [vmem:[%s169 + $0x18] sm:$0xff]
        %v176 = vld [vmem:[%s169 + $0x20] sm:$0xff]
        %v177 = vld [vmem:[%s169 + $0x28] sm:$0xff]
        %v178 = vld [vmem:[%s169 + $0x30] sm:$0xff]
        %v179 = vld [vmem:[%s169 + $0x38] sm:$0xff]
        %v180 = vld [vmem:[%s169 + $0x40] sm:$0xff]
        %v181 = vld [vmem:[%s169 + $0x48] sm:$0xff]
        %v182 = vld [vmem:[%s169 + $0x50] sm:$0xff]
        %v183 = vld [vmem:[%s169 + $0x58] sm:$0xff]
        %v184 = vld [vmem:[%s169 + $0x60] sm:$0xff]
        %v185 = vld [vmem:[%s169 + $0x68] sm:$0xff]
        %v186 = vld [vmem:[%s169 + $0x70] sm:$0xff]
        %v187 = vld [vmem:[%s169 + $0x78] sm:$0xff]
        %v188 = vcvt.f32.s32.to.zero.pseudo %v172
        %v189 = vcvt.f32.s32.to.zero.pseudo %v173
        %v190 = vcvt.f32.s32.to.zero.pseudo %v174
        %v191 = vcvt.f32.s32.to.zero.pseudo %v175
        %v192 = vcvt.f32.s32.to.zero.pseudo %v176
        %v193 = vcvt.f32.s32.to.zero.pseudo %v177
        %v194 = vcvt.f32.s32.to.zero.pseudo %v178
        %v195 = vcvt.f32.s32.to.zero.pseudo %v179
        %v196 = vcvt.f32.s32.to.zero.pseudo %v180
        %v197 = vcvt.f32.s32.to.zero.pseudo %v181
        %v198 = vcvt.f32.s32.to.zero.pseudo %v182
        %v199 = vcvt.f32.s32.to.zero.pseudo %v183
        %v200 = vcvt.f32.s32.to.zero.pseudo %v184
        %v201 = vcvt.f32.s32.to.zero.pseudo %v185
        %v202 = vcvt.f32.s32.to.zero.pseudo %v186
        %v203 = vcvt.f32.s32.to.zero.pseudo %v187
        %v204 = vlaneseq
        %v205 = vand.u32 %v204, 127
        %206 = vset.pattern.permute.xlu0 0
        %207 = vperm.xlu0 %206, %v188
        %v208 = vpop.permute.xlu0 %207
        %209 = vset.pattern.permute.xlu0 0
        %210 = vperm.xlu0 %209, %v189
        %v211 = vpop.permute.xlu0 %210
        %212 = vset.pattern.permute.xlu0 0
        %213 = vperm.xlu0 %212, %v190
        %v214 = vpop.permute.xlu0 %213
        %215 = vset.pattern.permute.xlu0 0
        %216 = vperm.xlu0 %215, %v191
        %v217 = vpop.permute.xlu0 %216
        %218 = vset.pattern.permute.xlu0 0
        %219 = vperm.xlu0 %218, %v192
        %v220 = vpop.permute.xlu0 %219
        %221 = vset.pattern.permute.xlu0 0
        %222 = vperm.xlu0 %221, %v193
        %v223 = vpop.permute.xlu0 %222
        %224 = vset.pattern.permute.xlu0 0
        %225 = vperm.xlu0 %224, %v194
        %v226 = vpop.permute.xlu0 %225
        %227 = vset.pattern.permute.xlu0 0
        %228 = vperm.xlu0 %227, %v195
        %v229 = vpop.permute.xlu0 %228
        %230 = vset.pattern.permute.xlu0 0
        %231 = vperm.xlu0 %230, %v196
        %v232 = vpop.permute.xlu0 %231
        %233 = vset.pattern.permute.xlu0 0
        %234 = vperm.xlu0 %233, %v197
        %v235 = vpop.permute.xlu0 %234
        %236 = vset.pattern.permute.xlu0 0
        %237 = vperm.xlu0 %236, %v198
        %v238 = vpop.permute.xlu0 %237
        %239 = vset.pattern.permute.xlu0 0
        %240 = vperm.xlu0 %239, %v199
        %v241 = vpop.permute.xlu0 %240
        %242 = vset.pattern.permute.xlu0 0
        %243 = vperm.xlu0 %242, %v200
        %v244 = vpop.permute.xlu0 %243
        %245 = vset.pattern.permute.xlu0 0
        %246 = vperm.xlu0 %245, %v201
        %v247 = vpop.permute.xlu0 %246
        %248 = vset.pattern.permute.xlu0 0
        %249 = vperm.xlu0 %248, %v202
        %v250 = vpop.permute.xlu0 %249
        %251 = vset.pattern.permute.xlu0 0
        %252 = vperm.xlu0 %251, %v203
        %v253 = vpop.permute.xlu0 %252
        %vm254 = vcmp.eq.s32.totalorder %v205, %v208
        %vm255 = vcmp.eq.s32.totalorder %v205, %v211
        %vm256 = vcmp.eq.s32.totalorder %v205, %v214
        %vm257 = vcmp.eq.s32.totalorder %v205, %v217
        %vm258 = vcmp.eq.s32.totalorder %v205, %v220
        %vm259 = vcmp.eq.s32.totalorder %v205, %v223
        %vm260 = vcmp.eq.s32.totalorder %v205, %v226
        %vm261 = vcmp.eq.s32.totalorder %v205, %v229
        %vm262 = vcmp.eq.s32.totalorder %v205, %v232
        %vm263 = vcmp.eq.s32.totalorder %v205, %v235
        %vm264 = vcmp.eq.s32.totalorder %v205, %v238
        %vm265 = vcmp.eq.s32.totalorder %v205, %v241
        %vm266 = vcmp.eq.s32.totalorder %v205, %v244
        %vm267 = vcmp.eq.s32.totalorder %v205, %v247
        %vm268 = vcmp.eq.s32.totalorder %v205, %v250
        %vm269 = vcmp.eq.s32.totalorder %v205, %v253
        %v270 = vsel %vm254, 1, 0
        %v271 = vsel %vm255, 1, 0
        %v272 = vsel %vm256, 1, 0
        %v273 = vsel %vm257, 1, 0
        %v274 = vsel %vm258, 1, 0
        %v275 = vsel %vm259, 1, 0
        %v276 = vsel %vm260, 1, 0
        %v277 = vsel %vm261, 1, 0
        %v278 = vsel %vm262, 1, 0
        %v279 = vsel %vm263, 1, 0
        %v280 = vsel %vm264, 1, 0
        %v281 = vsel %vm265, 1, 0
        %v282 = vsel %vm266, 1, 0
        %v283 = vsel %vm267, 1, 0
        %v284 = vsel %vm268, 1, 0
        %v285 = vsel %vm269, 1, 0
        %v286 = vcvt.s32.f32 %v270
        %v287 = vcvt.s32.f32 %v271
        %v288 = vcvt.s32.f32 %v272
        %v289 = vcvt.s32.f32 %v273
        %v290 = vcvt.s32.f32 %v274
        %v291 = vcvt.s32.f32 %v275
        %v292 = vcvt.s32.f32 %v276
        %v293 = vcvt.s32.f32 %v277
        %v294 = vcvt.s32.f32 %v278
        %v295 = vcvt.s32.f32 %v279
        %v296 = vcvt.s32.f32 %v280
        %v297 = vcvt.s32.f32 %v281
        %v298 = vcvt.s32.f32 %v282
        %v299 = vcvt.s32.f32 %v283
        %v300 = vcvt.s32.f32 %v284
        %v301 = vcvt.s32.f32 %v285
        %v302 = vadd.f32 %v286, 0.0
        %v303 = vadd.f32 %v287, 0.0
        %v304 = vadd.f32 %v288, 0.0
        %v305 = vadd.f32 %v289, 0.0
        %v306 = vadd.f32 %v290, 0.0
        %v307 = vadd.f32 %v291, 0.0
        %v308 = vadd.f32 %v292, 0.0
        %v309 = vadd.f32 %v293, 0.0
        %v310 = vadd.f32 %v294, 0.0
        %v311 = vadd.f32 %v295, 0.0
        %v312 = vadd.f32 %v296, 0.0
        %v313 = vadd.f32 %v297, 0.0
        %v314 = vadd.f32 %v298, 0.0
        %v315 = vadd.f32 %v299, 0.0
        %v316 = vadd.f32 %v300, 0.0
        %v317 = vadd.f32 %v301, 0.0
        %v318 = vadd.s32 %v188, 7
        %v319 = vadd.s32 %v189, 7
        %v320 = vadd.s32 %v190, 7
        %v321 = vadd.s32 %v191, 7
        %v322 = vadd.s32 %v192, 7
        %v323 = vadd.s32 %v193, 7
        %v324 = vadd.s32 %v194, 7
        %v325 = vadd.s32 %v195, 7
        %v326 = vadd.s32 %v196, 7
        %v327 = vadd.s32 %v197, 7
        %v328 = vadd.s32 %v198, 7
        %v329 = vadd.s32 %v199, 7
        %v330 = vadd.s32 %v200, 7
        %v331 = vadd.s32 %v201, 7
        %v332 = vadd.s32 %v202, 7
        %v333 = vadd.s32 %v203, 7
        %334 = vset.pattern.permute.xlu0 1
        %335 = vperm.xlu0 %334, %v318
        %v336 = vpop.permute.xlu0 %335
        %337 = vset.pattern.permute.xlu0 1
        %338 = vperm.xlu0 %337, %v319
        %v339 = vpop.permute.xlu0 %338
        %340 = vset.pattern.permute.xlu0 1
        %341 = vperm.xlu0 %340, %v320
        %v342 = vpop.permute.xlu0 %341
        %343 = vset.pattern.permute.xlu0 1
        %344 = vperm.xlu0 %343, %v321
        %v345 = vpop.permute.xlu0 %344
        %346 = vset.pattern.permute.xlu0 1
        %347 = vperm.xlu0 %346, %v322
        %v348 = vpop.permute.xlu0 %347
        %349 = vset.pattern.permute.xlu0 1
        %350 = vperm.xlu0 %349, %v323
        %v351 = vpop.permute.xlu0 %350
        %352 = vset.pattern.permute.xlu0 1
        %353 = vperm.xlu0 %352, %v324
        %v354 = vpop.permute.xlu0 %353
        %355 = vset.pattern.permute.xlu0 1
        %356 = vperm.xlu0 %355, %v325
        %v357 = vpop.permute.xlu0 %356
        %358 = vset.pattern.permute.xlu0 1
        %359 = vperm.xlu0 %358, %v326
        %v360 = vpop.permute.xlu0 %359
        %361 = vset.pattern.permute.xlu0 1
        %362 = vperm.xlu0 %361, %v327
        %v363 = vpop.permute.xlu0 %362
        %364 = vset.pattern.permute.xlu0 1
        %365 = vperm.xlu0 %364, %v328
        %v366 = vpop.permute.xlu0 %365
        %367 = vset.pattern.permute.xlu0 1
        %368 = vperm.xlu0 %367, %v329
        %v369 = vpop.permute.xlu0 %368
        %370 = vset.pattern.permute.xlu0 1
        %371 = vperm.xlu0 %370, %v330
        %v372 = vpop.permute.xlu0 %371
        %373 = vset.pattern.permute.xlu0 1
        %374 = vperm.xlu0 %373, %v331
        %v375 = vpop.permute.xlu0 %374
        %376 = vset.pattern.permute.xlu0 1
        %377 = vperm.xlu0 %376, %v332
        %v378 = vpop.permute.xlu0 %377
        %379 = vset.pattern.permute.xlu0 1
        %380 = vperm.xlu0 %379, %v333
        %v381 = vpop.permute.xlu0 %380
        %vm382 = vcmp.eq.s32.totalorder %v205, %v336
        %vm383 = vcmp.eq.s32.totalorder %v205, %v339
        %vm384 = vcmp.eq.s32.totalorder %v205, %v342
        %vm385 = vcmp.eq.s32.totalorder %v205, %v345
        %vm386 = vcmp.eq.s32.totalorder %v205, %v348
        %vm387 = vcmp.eq.s32.totalorder %v205, %v351
        %vm388 = vcmp.eq.s32.totalorder %v205, %v354
        %vm389 = vcmp.eq.s32.totalorder %v205, %v357
        %vm390 = vcmp.eq.s32.totalorder %v205, %v360
        %vm391 = vcmp.eq.s32.totalorder %v205, %v363
        %vm392 = vcmp.eq.s32.totalorder %v205, %v366
        %vm393 = vcmp.eq.s32.totalorder %v205, %v369
        %vm394 = vcmp.eq.s32.totalorder %v205, %v372
        %vm395 = vcmp.eq.s32.totalorder %v205, %v375
        %vm396 = vcmp.eq.s32.totalorder %v205, %v378
        %vm397 = vcmp.eq.s32.totalorder %v205, %v381
        %v398 = vsel %vm382, 1, 0
        %v399 = vsel %vm383, 1, 0
        %v400 = vsel %vm384, 1, 0
        %v401 = vsel %vm385, 1, 0
        %v402 = vsel %vm386, 1, 0
        %v403 = vsel %vm387, 1, 0
        %v404 = vsel %vm388, 1, 0
        %v405 = vsel %vm389, 1, 0
        %v406 = vsel %vm390, 1, 0
        %v407 = vsel %vm391, 1, 0
        %v408 = vsel %vm392, 1, 0
        %v409 = vsel %vm393, 1, 0
        %v410 = vsel %vm394, 1, 0
        %v411 = vsel %vm395, 1, 0
        %v412 = vsel %vm396, 1, 0
        %v413 = vsel %vm397, 1, 0
        %v414 = vcvt.s32.f32 %v398
        %v415 = vcvt.s32.f32 %v399
        %v416 = vcvt.s32.f32 %v400
        %v417 = vcvt.s32.f32 %v401
        %v418 = vcvt.s32.f32 %v402
        %v419 = vcvt.s32.f32 %v403
        %v420 = vcvt.s32.f32 %v404
        %v421 = vcvt.s32.f32 %v405
        %v422 = vcvt.s32.f32 %v406
        %v423 = vcvt.s32.f32 %v407
        %v424 = vcvt.s32.f32 %v408
        %v425 = vcvt.s32.f32 %v409
        %v426 = vcvt.s32.f32 %v410
        %v427 = vcvt.s32.f32 %v411
        %v428 = vcvt.s32.f32 %v412
        %v429 = vcvt.s32.f32 %v413
        %v430 = vadd.f32 %v302, %v414
        %v431 = vadd.f32 %v303, %v415
        %v432 = vadd.f32 %v304, %v416
        %v433 = vadd.f32 %v305, %v417
        %v434 = vadd.f32 %v306, %v418
        %v435 = vadd.f32 %v307, %v419
        %v436 = vadd.f32 %v308, %v420
        %v437 = vadd.f32 %v309, %v421
        %v438 = vadd.f32 %v310, %v422
        %v439 = vadd.f32 %v311, %v423
        %v440 = vadd.f32 %v312, %v424
        %v441 = vadd.f32 %v313, %v425
        %v442 = vadd.f32 %v314, %v426
        %v443 = vadd.f32 %v315, %v427
        %v444 = vadd.f32 %v316, %v428
        %v445 = vadd.f32 %v317, %v429
        %v446 = vadd.s32 %v188, 14
        %v447 = vadd.s32 %v189, 14
        %v448 = vadd.s32 %v190, 14
        %v449 = vadd.s32 %v191, 14
        %v450 = vadd.s32 %v192, 14
        %v451 = vadd.s32 %v193, 14
        %v452 = vadd.s32 %v194, 14
        %v453 = vadd.s32 %v195, 14
        %v454 = vadd.s32 %v196, 14
        %v455 = vadd.s32 %v197, 14
        %v456 = vadd.s32 %v198, 14
        %v457 = vadd.s32 %v199, 14
        %v458 = vadd.s32 %v200, 14
        %v459 = vadd.s32 %v201, 14
        %v460 = vadd.s32 %v202, 14
        %v461 = vadd.s32 %v203, 14
        %462 = vset.pattern.permute.xlu0 2
        %463 = vperm.xlu0 %462, %v446
        %v464 = vpop.permute.xlu0 %463
        %465 = vset.pattern.permute.xlu0 2
        %466 = vperm.xlu0 %465, %v447
        %v467 = vpop.permute.xlu0 %466
        %468 = vset.pattern.permute.xlu0 2
        %469 = vperm.xlu0 %468, %v448
        %v470 = vpop.permute.xlu0 %469
        %471 = vset.pattern.permute.xlu0 2
        %472 = vperm.xlu0 %471, %v449
        %v473 = vpop.permute.xlu0 %472
        %474 = vset.pattern.permute.xlu0 2
        %475 = vperm.xlu0 %474, %v450
        %v476 = vpop.permute.xlu0 %475
        %477 = vset.pattern.permute.xlu0 2
        %478 = vperm.xlu0 %477, %v451
        %v479 = vpop.permute.xlu0 %478
        %480 = vset.pattern.permute.xlu0 2
        %481 = vperm.xlu0 %480, %v452
        %v482 = vpop.permute.xlu0 %481
        %483 = vset.pattern.permute.xlu0 2
        %484 = vperm.xlu0 %483, %v453
        %v485 = vpop.permute.xlu0 %484
        %486 = vset.pattern.permute.xlu0 2
        %487 = vperm.xlu0 %486, %v454
        %v488 = vpop.permute.xlu0 %487
        %489 = vset.pattern.permute.xlu0 2
        %490 = vperm.xlu0 %489, %v455
        %v491 = vpop.permute.xlu0 %490
        %492 = vset.pattern.permute.xlu0 2
        %493 = vperm.xlu0 %492, %v456
        %v494 = vpop.permute.xlu0 %493
        %495 = vset.pattern.permute.xlu0 2
        %496 = vperm.xlu0 %495, %v457
        %v497 = vpop.permute.xlu0 %496
        %498 = vset.pattern.permute.xlu0 2
        %499 = vperm.xlu0 %498, %v458
        %v500 = vpop.permute.xlu0 %499
        %501 = vset.pattern.permute.xlu0 2
        %502 = vperm.xlu0 %501, %v459
        %v503 = vpop.permute.xlu0 %502
        %504 = vset.pattern.permute.xlu0 2
        %505 = vperm.xlu0 %504, %v460
        %v506 = vpop.permute.xlu0 %505
        %507 = vset.pattern.permute.xlu0 2
        %508 = vperm.xlu0 %507, %v461
        %v509 = vpop.permute.xlu0 %508
        %vm510 = vcmp.eq.s32.totalorder %v205, %v464
        %vm511 = vcmp.eq.s32.totalorder %v205, %v467
        %vm512 = vcmp.eq.s32.totalorder %v205, %v470
        %vm513 = vcmp.eq.s32.totalorder %v205, %v473
        %vm514 = vcmp.eq.s32.totalorder %v205, %v476
        %vm515 = vcmp.eq.s32.totalorder %v205, %v479
        %vm516 = vcmp.eq.s32.totalorder %v205, %v482
        %vm517 = vcmp.eq.s32.totalorder %v205, %v485
        %vm518 = vcmp.eq.s32.totalorder %v205, %v488
        %vm519 = vcmp.eq.s32.totalorder %v205, %v491
        %vm520 = vcmp.eq.s32.totalorder %v205, %v494
        %vm521 = vcmp.eq.s32.totalorder %v205, %v497
        %vm522 = vcmp.eq.s32.totalorder %v205, %v500
        %vm523 = vcmp.eq.s32.totalorder %v205, %v503
        %vm524 = vcmp.eq.s32.totalorder %v205, %v506
        %vm525 = vcmp.eq.s32.totalorder %v205, %v509
        %v526 = vsel %vm510, 1, 0
        %v527 = vsel %vm511, 1, 0
        %v528 = vsel %vm512, 1, 0
        %v529 = vsel %vm513, 1, 0
        %v530 = vsel %vm514, 1, 0
        %v531 = vsel %vm515, 1, 0
        %v532 = vsel %vm516, 1, 0
        %v533 = vsel %vm517, 1, 0
        %v534 = vsel %vm518, 1, 0
        %v535 = vsel %vm519, 1, 0
        %v536 = vsel %vm520, 1, 0
        %v537 = vsel %vm521, 1, 0
        %v538 = vsel %vm522, 1, 0
        %v539 = vsel %vm523, 1, 0
        %v540 = vsel %vm524, 1, 0
        %v541 = vsel %vm525, 1, 0
        %v542 = vcvt.s32.f32 %v526
        %v543 = vcvt.s32.f32 %v527
        %v544 = vcvt.s32.f32 %v528
        %v545 = vcvt.s32.f32 %v529
        %v546 = vcvt.s32.f32 %v530
        %v547 = vcvt.s32.f32 %v531
        %v548 = vcvt.s32.f32 %v532
        %v549 = vcvt.s32.f32 %v533
        %v550 = vcvt.s32.f32 %v534
        %v551 = vcvt.s32.f32 %v535
        %v552 = vcvt.s32.f32 %v536
        %v553 = vcvt.s32.f32 %v537
        %v554 = vcvt.s32.f32 %v538
        %v555 = vcvt.s32.f32 %v539
        %v556 = vcvt.s32.f32 %v540
        %v557 = vcvt.s32.f32 %v541
        %v558 = vadd.f32 %v430, %v542
        %v559 = vadd.f32 %v431, %v543
        %v560 = vadd.f32 %v432, %v544
        %v561 = vadd.f32 %v433, %v545
        %v562 = vadd.f32 %v434, %v546
        %v563 = vadd.f32 %v435, %v547
        %v564 = vadd.f32 %v436, %v548
        %v565 = vadd.f32 %v437, %v549
        %v566 = vadd.f32 %v438, %v550
        %v567 = vadd.f32 %v439, %v551
        %v568 = vadd.f32 %v440, %v552
        %v569 = vadd.f32 %v441, %v553
        %v570 = vadd.f32 %v442, %v554
        %v571 = vadd.f32 %v443, %v555
        %v572 = vadd.f32 %v444, %v556
        %v573 = vadd.f32 %v445, %v557
        %v574 = vld [vmem:[%s1] sm:$0xff]
        %v575 = vld [vmem:[%s1 + $0x8] sm:$0xff]
        %v576 = vld [vmem:[%s1 + $0x10] sm:$0x1f]
        %v577 = vld [vmem:[%s2] sm:$0xff]
        %v578 = vld [vmem:[%s2 + $0x8] sm:$0xf]
        %vm579 = vcmask 97280
        %v581 = vsel %vm579, %v172, 0
        %v584 = vsel %vm579, %v173, 0
        %v587 = vsel %vm579, %v174, 0
        %v590 = vsel %vm579, %v175, 0
        %v593 = vsel %vm579, %v176, 0
        %v596 = vsel %vm579, %v177, 0
        %v599 = vsel %vm579, %v178, 0
        %v602 = vsel %vm579, %v179, 0
        %v605 = vsel %vm579, %v180, 0
        %v608 = vsel %vm579, %v181, 0
        %v611 = vsel %vm579, %v182, 0
        %v614 = vsel %vm579, %v183, 0
        %v617 = vsel %vm579, %v184, 0
        %v620 = vsel %vm579, %v185, 0
        %v623 = vsel %vm579, %v186, 0
        %v626 = vsel %vm579, %v187, 0
        %vm628 = vcmask 1043456
        %v630 = vsel %vm628, %v578, 0
        %632 = vmatprep.subr.mxu0 0.0
        %633 = vmatpush1.msra.mxu0 %v577
        %634 = vmatprep.subr.mxu0 0.0
        %635 = vmatpush1.msra.mxu0 %v630
        %636 = vmatprep.subr.mxu0 0.0
        %637 = vmatpush1.msra.mxu0 0.0
        %638 = vmatprep.subr.mxu0 0.0
        %639 = vmatpush1.msra.mxu0 0.0
        %640 = vmatprep.subr.mxu0 0.0
        %641 = vmatpush1.msra.mxu0 0.0
        %642 = vmatprep.subr.mxu0 0.0
        %643 = vmatpush1.msra.mxu0 0.0
        %644 = vmatprep.subr.mxu0 0.0
        %645 = vmatpush1.msra.mxu0 0.0
        %646 = vmatprep.subr.mxu0 0.0
        %647 = vmatpush1.msra.mxu0 0.0
        %648 = vmatprep.subr.mxu0 0.0
        %649 = vmatpush1.msra.mxu0 0.0
        %650 = vmatprep.subr.mxu0 0.0
        %651 = vmatpush1.msra.mxu0 0.0
        %652 = vmatprep.subr.mxu0 0.0
        %653 = vmatpush1.msra.mxu0 0.0
        %654 = vmatprep.subr.mxu0 0.0
        %655 = vmatpush1.msra.mxu0 0.0
        %656 = vmatprep.subr.mxu0 0.0
        %657 = vmatpush1.msra.mxu0 0.0
        %658 = vmatprep.subr.mxu0 0.0
        %659 = vmatpush1.msra.mxu0 0.0
        %660 = vmatprep.subr.mxu0 0.0
        %661 = vmatpush1.msra.mxu0 0.0
        %662 = vmatprep.subr.mxu0 0.0
        %663 = vmatpush1.msra.mxu0 0.0
        %664 = vmatprep.subr.mxu0 0.0
        %665 = vmatpush1.msra.mxu0 0.0
        %666 = vmatprep.subr.mxu0 0.0
        %667 = vmatpush1.msra.mxu0 0.0
        %668 = vmatprep.subr.mxu0 0.0
        %669 = vmatpush1.msra.mxu0 0.0
        %670 = vmatprep.subr.mxu0 0.0
        %671 = vmatpush1.msra.mxu0 0.0
        %672 = vmatprep.subr.mxu0 0.0
        %673 = vmatpush1.msra.mxu0 0.0
        %674 = vmatprep.subr.mxu0 0.0
        %675 = vmatpush1.msra.mxu0 0.0
        %676 = vmatprep.subr.mxu0 0.0
        %677 = vmatpush1.msra.mxu0 0.0
        %678 = vmatprep.subr.mxu0 0.0
        %679 = vmatpush1.msra.mxu0 0.0
        %680 = vmatprep.subr.mxu0 0.0
        %681 = vmatpush1.msra.mxu0 0.0
        %682 = vmatprep.subr.mxu0 0.0
        %683 = vmatpush1.msra.mxu0 0.0
        %684 = vmatprep.subr.mxu0 0.0
        %685 = vmatpush1.msra.mxu0 0.0
        %686 = vmatprep.subr.mxu0 0.0
        %687 = vmatpush1.msra.mxu0 0.0
        %688 = vmatprep.subr.mxu0 0.0
        %689 = vmatpush1.msra.mxu0 0.0
        %690 = vmatprep.subr.mxu0 0.0
        %691 = vmatpush1.msra.mxu0 0.0
        %692 = vmatprep.subr.mxu0 0.0
        %693 = vmatpush1.msra.mxu0 0.0
        %694 = vmatprep.subr.mxu0 0.0
        %695 = vmatpush1.msra.mxu0 0.0
        %696 = vmatprep.mubr.f32.mxu0 0.0
        %697 = vmatmul.mubr.f32.gmra.mrb[0].mxu0 %v581
        %v698 = vpop.f32.mrb[0].mxu0
        %v699 = vadd.f32 0.0, %v698
        %v700 = vpop.f32.mrb[0].mxu0
        %701 = vmatprep.mubr.f32.mxu0 0.0
        %702 = vmatmul.mubr.f32.gmra.mrb[0].mxu0 %v584
        %v703 = vpop.f32.mrb[0].mxu0
        %v704 = vadd.f32 0.0, %v703
        %v705 = vpop.f32.mrb[0].mxu0
        %706 = vmatprep.mubr.f32.mxu0 0.0
        %707 = vmatmul.mubr.f32.gmra.mrb[0].mxu0 %v587
        %v708 = vpop.f32.mrb[0].mxu0
        %v709 = vadd.f32 0.0, %v708
        %v710 = vpop.f32.mrb[0].mxu0
        %711 = vmatprep.mubr.f32.mxu0 0.0
        %712 = vmatmul.mubr.f32.gmra.mrb[0].mxu0 %v590
        %v713 = vpop.f32.mrb[0].mxu0
        %v714 = vadd.f32 0.0, %v713
        %v715 = vpop.f32.mrb[0].mxu0
        %716 = vmatprep.mubr.f32.mxu0 0.0
        %717 = vmatmul.mubr.f32.gmra.mrb[0].mxu0 %v593
        %v718 = vpop.f32.mrb[0].mxu0
        %v719 = vadd.f32 0.0, %v718
        %v720 = vpop.f32.mrb[0].mxu0
        %721 = vmatprep.mubr.f32.mxu0 0.0
        %722 = vmatmul.mubr.f32.gmra.mrb[0].mxu0 %v596
        %v723 = vpop.f32.mrb[0].mxu0
        %v724 = vadd.f32 0.0, %v723
        %v725 = vpop.f32.mrb[0].mxu0
        %726 = vmatprep.mubr.f32.mxu0 0.0
        %727 = vmatmul.mubr.f32.gmra.mrb[0].mxu0 %v599
        %v728 = vpop.f32.mrb[0].mxu0
        %v729 = vadd.f32 0.0, %v728
        %v730 = vpop.f32.mrb[0].mxu0
        %731 = vmatprep.mubr.f32.mxu0 0.0
        %732 = vmatmul.mubr.f32.gmra.mrb[0].mxu0 %v602
        %v733 = vpop.f32.mrb[0].mxu0
        %v734 = vadd.f32 0.0, %v733
        %v735 = vpop.f32.mrb[0].mxu0
        %736 = vmatprep.mubr.f32.mxu0 0.0
        %737 = vmatmul.mubr.f32.gmra.mrb[0].mxu0 %v605
        %v738 = vpop.f32.mrb[0].mxu0
        %v739 = vadd.f32 0.0, %v738
        %v740 = vpop.f32.mrb[0].mxu0
        %741 = vmatprep.mubr.f32.mxu0 0.0
        %742 = vmatmul.mubr.f32.gmra.mrb[0].mxu0 %v608
        %v743 = vpop.f32.mrb[0].mxu0
        %v744 = vadd.f32 0.0, %v743
        %v745 = vpop.f32.mrb[0].mxu0
        %746 = vmatprep.mubr.f32.mxu0 0.0
        %747 = vmatmul.mubr.f32.gmra.mrb[0].mxu0 %v611
        %v748 = vpop.f32.mrb[0].mxu0
        %v749 = vadd.f32 0.0, %v748
        %v750 = vpop.f32.mrb[0].mxu0
        %751 = vmatprep.mubr.f32.mxu0 0.0
        %752 = vmatmul.mubr.f32.gmra.mrb[0].mxu0 %v614
        %v753 = vpop.f32.mrb[0].mxu0
        %v754 = vadd.f32 0.0, %v753
        %v755 = vpop.f32.mrb[0].mxu0
        %756 = vmatprep.mubr.f32.mxu0 0.0
        %757 = vmatmul.mubr.f32.gmra.mrb[0].mxu0 %v617
        %v758 = vpop.f32.mrb[0].mxu0
        %v759 = vadd.f32 0.0, %v758
        %v760 = vpop.f32.mrb[0].mxu0
        %761 = vmatprep.mubr.f32.mxu0 0.0
        %762 = vmatmul.mubr.f32.gmra.mrb[0].mxu0 %v620
        %v763 = vpop.f32.mrb[0].mxu0
        %v764 = vadd.f32 0.0, %v763
        %v765 = vpop.f32.mrb[0].mxu0
        %766 = vmatprep.mubr.f32.mxu0 0.0
        %767 = vmatmul.mubr.f32.gmra.mrb[0].mxu0 %v623
        %v768 = vpop.f32.mrb[0].mxu0
        %v769 = vadd.f32 0.0, %v768
        %v770 = vpop.f32.mrb[0].mxu0
        %771 = vmatprep.mubr.f32.mxu0 0.0
        %772 = vmatmul.mubr.f32.gmra.mrb[0].mxu0 %v626
        %v773 = vpop.f32.mrb[0].mxu0
        %v774 = vadd.f32 0.0, %v773
        %v775 = vpop.f32.mrb[0].mxu0
        %776 = vdwg.mxu0
        %vm777 = vcmask 171008
        %v779 = vsel %vm777, %v558, 0
        %v782 = vsel %vm777, %v559, 0
        %v785 = vsel %vm777, %v560, 0
        %v788 = vsel %vm777, %v561, 0
        %v791 = vsel %vm777, %v562, 0
        %v794 = vsel %vm777, %v563, 0
        %v797 = vsel %vm777, %v564, 0
        %v800 = vsel %vm777, %v565, 0
        %v803 = vsel %vm777, %v566, 0
        %v806 = vsel %vm777, %v567, 0
        %v809 = vsel %vm777, %v568, 0
        %v812 = vsel %vm777, %v569, 0
        %v815 = vsel %vm777, %v570, 0
        %v818 = vsel %vm777, %v571, 0
        %v821 = vsel %vm777, %v572, 0
        %v824 = vsel %vm777, %v573, 0
        %vm826 = vcmask 1044480
        %v828 = vsel %vm826, %v576, 0
        %830 = vmatprep.subr.mxu0 0.0
        %831 = vmatpush1.msra.mxu0 %v574
        %832 = vmatprep.subr.mxu0 0.0
        %833 = vmatpush1.msra.mxu0 %v575
        %834 = vmatprep.subr.mxu0 0.0
        %835 = vmatpush1.msra.mxu0 %v828
        %836 = vmatprep.subr.mxu0 0.0
        %837 = vmatpush1.msra.mxu0 0.0
        %838 = vmatprep.subr.mxu0 0.0
        %839 = vmatpush1.msra.mxu0 0.0
        %840 = vmatprep.subr.mxu0 0.0
        %841 = vmatpush1.msra.mxu0 0.0
        %842 = vmatprep.subr.mxu0 0.0
        %843 = vmatpush1.msra.mxu0 0.0
        %844 = vmatprep.subr.mxu0 0.0
        %845 = vmatpush1.msra.mxu0 0.0
        %846 = vmatprep.subr.mxu0 0.0
        %847 = vmatpush1.msra.mxu0 0.0
        %848 = vmatprep.subr.mxu0 0.0
        %849 = vmatpush1.msra.mxu0 0.0
        %850 = vmatprep.subr.mxu0 0.0
        %851 = vmatpush1.msra.mxu0 0.0
        %852 = vmatprep.subr.mxu0 0.0
        %853 = vmatpush1.msra.mxu0 0.0
        %854 = vmatprep.subr.mxu0 0.0
        %855 = vmatpush1.msra.mxu0 0.0
        %856 = vmatprep.subr.mxu0 0.0
        %857 = vmatpush1.msra.mxu0 0.0
        %858 = vmatprep.subr.mxu0 0.0
        %859 = vmatpush1.msra.mxu0 0.0
        %860 = vmatprep.subr.mxu0 0.0
        %861 = vmatpush1.msra.mxu0 0.0
        %862 = vmatprep.subr.mxu0 0.0
        %863 = vmatpush1.msra.mxu0 0.0
        %864 = vmatprep.subr.mxu0 0.0
        %865 = vmatpush1.msra.mxu0 0.0
        %866 = vmatprep.subr.mxu0 0.0
        %867 = vmatpush1.msra.mxu0 0.0
        %868 = vmatprep.subr.mxu0 0.0
        %869 = vmatpush1.msra.mxu0 0.0
        %870 = vmatprep.subr.mxu0 0.0
        %871 = vmatpush1.msra.mxu0 0.0
        %872 = vmatprep.subr.mxu0 0.0
        %873 = vmatpush1.msra.mxu0 0.0
        %874 = vmatprep.subr.mxu0 0.0
        %875 = vmatpush1.msra.mxu0 0.0
        %876 = vmatprep.subr.mxu0 0.0
        %877 = vmatpush1.msra.mxu0 0.0
        %878 = vmatprep.subr.mxu0 0.0
        %879 = vmatpush1.msra.mxu0 0.0
        %880 = vmatprep.subr.mxu0 0.0
        %881 = vmatpush1.msra.mxu0 0.0
        %882 = vmatprep.subr.mxu0 0.0
        %883 = vmatpush1.msra.mxu0 0.0
        %884 = vmatprep.subr.mxu0 0.0
        %885 = vmatpush1.msra.mxu0 0.0
        %886 = vmatprep.subr.mxu0 0.0
        %887 = vmatpush1.msra.mxu0 0.0
        %888 = vmatprep.subr.mxu0 0.0
        %889 = vmatpush1.msra.mxu0 0.0
        %890 = vmatprep.subr.mxu0 0.0
        %891 = vmatpush1.msra.mxu0 0.0
        %892 = vmatprep.subr.mxu0 0.0
        %893 = vmatpush1.msra.mxu0 0.0
        %894 = vmatprep.mubr.f32.mxu0 0.0
        %895 = vmatmul.mubr.f32.gmra.mrb[0].mxu0 %v779
        %v896 = vpop.f32.mrb[0].mxu0
        %v897 = vadd.f32 %v699, %v896
        %v898 = vpop.f32.mrb[0].mxu0
        %899 = vmatprep.mubr.f32.mxu0 0.0
        %900 = vmatmul.mubr.f32.gmra.mrb[0].mxu0 %v782
        %v901 = vpop.f32.mrb[0].mxu0
        %v902 = vadd.f32 %v704, %v901
        %v903 = vpop.f32.mrb[0].mxu0
        %904 = vmatprep.mubr.f32.mxu0 0.0
        %905 = vmatmul.mubr.f32.gmra.mrb[0].mxu0 %v785
        %v906 = vpop.f32.mrb[0].mxu0
        %v907 = vadd.f32 %v709, %v906
        %v908 = vpop.f32.mrb[0].mxu0
        %909 = vmatprep.mubr.f32.mxu0 0.0
        %910 = vmatmul.mubr.f32.gmra.mrb[0].mxu0 %v788
        %v911 = vpop.f32.mrb[0].mxu0
        %v912 = vadd.f32 %v714, %v911
        %v913 = vpop.f32.mrb[0].mxu0
        %914 = vmatprep.mubr.f32.mxu0 0.0
        %915 = vmatmul.mubr.f32.gmra.mrb[0].mxu0 %v791
        %v916 = vpop.f32.mrb[0].mxu0
        %v917 = vadd.f32 %v719, %v916
        %v918 = vpop.f32.mrb[0].mxu0
        %919 = vmatprep.mubr.f32.mxu0 0.0
        %920 = vmatmul.mubr.f32.gmra.mrb[0].mxu0 %v794
        %v921 = vpop.f32.mrb[0].mxu0
        %v922 = vadd.f32 %v724, %v921
        %v923 = vpop.f32.mrb[0].mxu0
        %924 = vmatprep.mubr.f32.mxu0 0.0
        %925 = vmatmul.mubr.f32.gmra.mrb[0].mxu0 %v797
        %v926 = vpop.f32.mrb[0].mxu0
        %v927 = vadd.f32 %v729, %v926
        %v928 = vpop.f32.mrb[0].mxu0
        %929 = vmatprep.mubr.f32.mxu0 0.0
        %930 = vmatmul.mubr.f32.gmra.mrb[0].mxu0 %v800
        %v931 = vpop.f32.mrb[0].mxu0
        %v932 = vadd.f32 %v734, %v931
        %v933 = vpop.f32.mrb[0].mxu0
        %934 = vmatprep.mubr.f32.mxu0 0.0
        %935 = vmatmul.mubr.f32.gmra.mrb[0].mxu0 %v803
        %v936 = vpop.f32.mrb[0].mxu0
        %v937 = vadd.f32 %v739, %v936
        %v938 = vpop.f32.mrb[0].mxu0
        %939 = vmatprep.mubr.f32.mxu0 0.0
        %940 = vmatmul.mubr.f32.gmra.mrb[0].mxu0 %v806
        %v941 = vpop.f32.mrb[0].mxu0
        %v942 = vadd.f32 %v744, %v941
        %v943 = vpop.f32.mrb[0].mxu0
        %944 = vmatprep.mubr.f32.mxu0 0.0
        %945 = vmatmul.mubr.f32.gmra.mrb[0].mxu0 %v809
        %v946 = vpop.f32.mrb[0].mxu0
        %v947 = vadd.f32 %v749, %v946
        %v948 = vpop.f32.mrb[0].mxu0
        %949 = vmatprep.mubr.f32.mxu0 0.0
        %950 = vmatmul.mubr.f32.gmra.mrb[0].mxu0 %v812
        %v951 = vpop.f32.mrb[0].mxu0
        %v952 = vadd.f32 %v754, %v951
        %v953 = vpop.f32.mrb[0].mxu0
        %954 = vmatprep.mubr.f32.mxu0 0.0
        %955 = vmatmul.mubr.f32.gmra.mrb[0].mxu0 %v815
        %v956 = vpop.f32.mrb[0].mxu0
        %v957 = vadd.f32 %v759, %v956
        %v958 = vpop.f32.mrb[0].mxu0
        %959 = vmatprep.mubr.f32.mxu0 0.0
        %960 = vmatmul.mubr.f32.gmra.mrb[0].mxu0 %v818
        %v961 = vpop.f32.mrb[0].mxu0
        %v962 = vadd.f32 %v764, %v961
        %v963 = vpop.f32.mrb[0].mxu0
        %964 = vmatprep.mubr.f32.mxu0 0.0
        %965 = vmatmul.mubr.f32.gmra.mrb[0].mxu0 %v821
        %v966 = vpop.f32.mrb[0].mxu0
        %v967 = vadd.f32 %v769, %v966
        %v968 = vpop.f32.mrb[0].mxu0
        %969 = vmatprep.mubr.f32.mxu0 0.0
        %970 = vmatmul.mubr.f32.gmra.mrb[0].mxu0 %v824
        %v971 = vpop.f32.mrb[0].mxu0
        %v972 = vadd.f32 %v774, %v971
        %v973 = vpop.f32.mrb[0].mxu0
        %974 = vdwg.mxu0
        %975 = vst [vmem:[%s164] sm:$0xff] %v897
        %976 = vst [vmem:[%s164 + $0x8] sm:$0xff] %v902
        %977 = vst [vmem:[%s164 + $0x10] sm:$0xff] %v907
        %978 = vst [vmem:[%s164 + $0x18] sm:$0xff] %v912
        %979 = vst [vmem:[%s164 + $0x20] sm:$0xff] %v917
        %980 = vst [vmem:[%s164 + $0x28] sm:$0xff] %v922
        %981 = vst [vmem:[%s164 + $0x30] sm:$0xff] %v927
        %982 = vst [vmem:[%s164 + $0x38] sm:$0xff] %v932
        %983 = vst [vmem:[%s164 + $0x40] sm:$0xff] %v937
        %984 = vst [vmem:[%s164 + $0x48] sm:$0xff] %v942
        %985 = vst [vmem:[%s164 + $0x50] sm:$0xff] %v947
        %986 = vst [vmem:[%s164 + $0x58] sm:$0xff] %v952
        %987 = vst [vmem:[%s164 + $0x60] sm:$0xff] %v957
        %988 = vst [vmem:[%s164 + $0x68] sm:$0xff] %v962
        %989 = vst [vmem:[%s164 + $0x70] sm:$0xff] %v967
        %990 = vst [vmem:[%s164 + $0x78] sm:$0xff] %v972
        %s991 = sand.u32 %s93, 1
        %s992 = scalar_lea.sflag [#allocation3], %s991
        %s993 = sand.u32 %s93, 1
        %s994 = smul.addr %s993, 128
        %s995 = scalar_lea.vmem [#allocation2], %s994
        // Predicated region
        $region33: #{tpu_custom_call.1} parent=31 // pred_check
          %p996 = pneg %p103
        $region34: #{tpu_custom_call.1} parent=31 // pred_check_branch
          %998 = sbr.rel (%p996) target = $region36
        $region35: #{tpu_custom_call.1} parent=31 // pred_region
          %s999 = smul.u32 16, %s17
          %s1001 = ssub.s32 2048, 2048
          %1002 = vsyncadd %s992, %s1001
          %s1003 = smul.addr %s999, 128
          %s1004 = scalar_lea.hbm %s3, %s1003
          %s1005 = sshll.u32 %s995, 4
          %s1006 = int_to_ptr.vmem [resolvable:$true] %s1005
          %1011 = dma.vmem_to_hbm [thread:$0]  %s1006, 2048, %s1004, %s992, 128, 128, 8
        $region36: #{tpu_custom_call.1} parent=31 // pred_fallthru
          _
      $region32: #{tpu_custom_call.1} parent=5 // pred_fallthru
        _
      %p1012 = scmp.le.s32.totalorder 2, %s12
      // Predicated region
      $region37: #{tpu_custom_call.1} parent=5 // pred_check
        %p1013 = pneg %p1012
      $region38: #{tpu_custom_call.1} parent=5 // pred_check_branch
        %1015 = sbr.rel (%p1013) target = $region40
      $region39: #{tpu_custom_call.1} parent=5 // pred_region
        %s1016 = ssub.s32 %s12, 2
        // Predicated region
        $region41: #{tpu_custom_call.1} parent=39 // pred_check
          %p1017 = pneg %p109
        $region42: #{tpu_custom_call.1} parent=39 // pred_check_branch
          %1019 = sbr.rel (%p1017) target = $region44
        $region43: #{tpu_custom_call.1} parent=39 // pred_region
          %s1020 = sand.u32 %s94, 1
          %s1021 = scalar_lea.sflag [#allocation3], %s1020
          %s1022 = sand.u32 %s94, 1
          %s1023 = smul.addr %s1022, 128
          %s1024 = scalar_lea.vmem [#allocation2], %s1023
          %1025 = dma.done %s1021, 2048
        $region44: #{tpu_custom_call.1} parent=39 // pred_fallthru
          _
      $region40: #{tpu_custom_call.1} parent=5 // pred_fallthru
        _
    $region6: #{tpu_custom_call.1} parent=1 // loop_footer
      %s16 = sadd.s32 1, %s12
    $region7: #{tpu_custom_call.1} parent=1 // loop_footer_branch
      %11 = sbr.rel target = $region3
    $region8: #{tpu_custom_call.1} parent=1 // loop_exit
      _
    %1026 = vsyncpa [#allocation3], 1
    %s1027 = scalar_lea.sflag [#allocation3], 1
    %1028 = vsyncpa %s1027, 1

</llo_original>
